<compile_context>
chip_gen: v5e
topology: v5e:2x2
jax: 0.10.0
libtpu: 0.0.40
codegen_flags: <defaults>
</compile_context>

<pallas_src>
import functools

import jax
import jax.numpy as jnp
from jax.experimental import pallas as pl
from jax.experimental.pallas import tpu as pltpu

N_STATES = 4     # CartPole-v0 observation dim
N_ACTIONS = 2    # CartPole-v0 action dim
HIDDEN = 10

LANE = 128                 # vreg lane width
MAX_TB = 16 * 1024         # max batch elements per grid step (multiple of 1024)
SMALL_BATCH = 512          # below this a fused XLA MLP beats the kernel launch


def net_kernel(x_ref, w1_ref, b1_ref, w2_ref, b2_ref, out_ref):
    """x_ref: (N_STATES, TB//128, 128) VMEM; out_ref: (N_ACTIONS, TB//128, 128) VMEM.
    w1_ref: (N_STATES*HIDDEN,) SMEM row-major (in, out);   b1_ref: (HIDDEN,) SMEM;
    w2_ref: (HIDDEN*N_ACTIONS,) SMEM row-major (in, out);  b2_ref: (N_ACTIONS,) SMEM.

    Pure VPU: for every hidden unit j, an unrolled chain of scalar-broadcast
    FMAs over the dense (TB//128, 128) batch slab, with the fc2 contraction
    folded into two running accumulators (hidden layer never materialized)."""
    x = x_ref[...]                                       # (N_STATES, R, 128) f32
    acc = [None] * N_ACTIONS
    for j in range(HIDDEN):
        # fc1 unit j + ReLU over the whole batch slab.
        h = x[0] * w1_ref[0 * HIDDEN + j]
        for k in range(1, N_STATES):
            h = h + x[k] * w1_ref[k * HIDDEN + j]
        h = jnp.maximum(h + b1_ref[j], 0.0)
        # Fold fc2 in immediately: acc_a += h * w2[j, a].
        for a in range(N_ACTIONS):
            term = h * w2_ref[j * N_ACTIONS + a]
            acc[a] = term if acc[a] is None else acc[a] + term
    for a in range(N_ACTIONS):
        out_ref[a] = (acc[a] + b2_ref[a]).astype(out_ref.dtype)   # dense 8x128 stores


def _choose_tile(batch):
    """Return (tile_batch, padded_batch).  Tile is one 128-lane row for tiny
    batches, otherwise a multiple of 1024 (so the (8,128) sublane rule holds),
    capped at MAX_TB and capped so the grid keeps >= 2 steps whenever there is
    more than one 1024-chunk of work (feeds both v7x TensorCores)."""
    if batch <= LANE:
        return LANE, LANE
    padded = -(-batch // 1024) * 1024
    tb = min(MAX_TB, padded)
    if padded >= 2048:
        tb = max(1024, min(tb, (padded // 2048) * 1024))
    padded = -(-padded // tb) * tb
    return tb, padded


def net_forward_cols(x_cols, w1, b1, w2, b2):
    """Column layout: x_cols is (N_STATES, B) f32 -> (N_ACTIONS, B) f32.
    Callers that keep activations batch-last use this to skip the transpose
    passes done by net_forward."""
    batch = x_cols.shape[1]
    tb, padded = _choose_tile(batch)
    rows_total = padded // LANE
    rows_tile = tb // LANE
    xp = jnp.pad(x_cols, ((0, 0), (0, padded - batch)))
    x3 = xp.reshape(N_STATES, rows_total, LANE)          # contiguous reshape

    out3 = pl.pallas_call(
        net_kernel,
        out_shape=jax.ShapeDtypeStruct((N_ACTIONS, rows_total, LANE), jnp.float32),
        grid_spec=pltpu.PrefetchScalarGridSpec(
            num_scalar_prefetch=0,
            grid=(padded // tb,),
            in_specs=[
                # x tile: (4, TB//128, 128) -- last two dims are (multiple of 8
                # or full dim, 128), first dim equals the full feature dim.
                pl.BlockSpec((N_STATES, rows_tile, LANE), lambda i: (0, i, 0)),
                # Weights / biases resident in SMEM, read as scalars.
                pl.BlockSpec(memory_space=pltpu.MemorySpace.SMEM),   # w1 (flat)
                pl.BlockSpec(memory_space=pltpu.MemorySpace.SMEM),   # b1
                pl.BlockSpec(memory_space=pltpu.MemorySpace.SMEM),   # w2 (flat)
                pl.BlockSpec(memory_space=pltpu.MemorySpace.SMEM),   # b2
            ],
            out_specs=pl.BlockSpec((N_ACTIONS, rows_tile, LANE), lambda i: (0, i, 0)),
        ),
        compiler_params=pltpu.CompilerParams(
            # Batch tiles are independent -> shard grid across v7x's 2 TCs;
            # neutral on single-TC v5e/v6e.
            dimension_semantics=("parallel",)),
    )(x3, w1.reshape(-1), b1, w2.reshape(-1), b2)

    return out3.reshape(N_ACTIONS, padded)[:, :batch]


def _mlp_xla(x, w1, b1, w2, b2):
    """Fused-XLA path for tiny action-selection batches."""
    h = jnp.maximum(jnp.dot(x, w1, precision=jax.lax.Precision.HIGHEST) + b1, 0.0)
    return jnp.dot(h, w2, precision=jax.lax.Precision.HIGHEST) + b2


@functools.partial(jax.jit, static_argnames=("force_kernel",))
def net_forward(x, w1, b1, w2, b2, force_kernel=False):
    """x: (B, N_STATES) f32 -> (B, N_ACTIONS) f32, matching Net.forward."""
    batch = x.shape[0]
    if batch < SMALL_BATCH and not force_kernel:
        # pallas_call launch + pad/transpose dominate tiny RL batches.
        return _mlp_xla(x, w1, b1, w2, b2)
    # TODO(synk): callers that can store replay batches as (features, batch)
    # should call net_forward_cols directly and fuse the downstream argmax to
    # skip these two transpose HBM passes.
    return net_forward_cols(x.T, w1, b1, w2, b2).T


def init_params(key):
    """Mirrors Net.__init__: weights ~ N(0, 0.1), biases ~ PyTorch Linear
    default U(-1/sqrt(fan_in), 1/sqrt(fan_in)).  Weights stored (in, out)."""
    k1, k2, k3, k4 = jax.random.split(key, 4)
    w1 = 0.1 * jax.random.normal(k1, (N_STATES, HIDDEN), jnp.float32)
    w2 = 0.1 * jax.random.normal(k2, (HIDDEN, N_ACTIONS), jnp.float32)
    b1 = jax.random.uniform(k3, (HIDDEN,), jnp.float32,
                            minval=-1.0 / jnp.sqrt(N_STATES),
                            maxval=1.0 / jnp.sqrt(N_STATES))
    b2 = jax.random.uniform(k4, (N_ACTIONS,), jnp.float32,
                            minval=-1.0 / jnp.sqrt(HIDDEN),
                            maxval=1.0 / jnp.sqrt(HIDDEN))
    return w1, b1, w2, b2


def reference_forward(x, w1, b1, w2, b2):
    return _mlp_xla(x, w1, b1, w2, b2)


if __name__ == "__main__":
    key = jax.random.PRNGKey(0)
    k_p, k1, k2 = jax.random.split(key, 3)
    w1, b1, w2, b2 = init_params(k_p)

    # Small RL-style batch: exercise the kernel path explicitly (one padded
    # (4, 1, 128) tile) and the default fused-XLA dispatch path.
    x_small = jax.random.normal(k1, (8, N_STATES), jnp.float32)
    ref_small = reference_forward(x_small, w1, b1, w2, b2)
    out_small_k = jax.block_until_ready(
        net_forward(x_small, w1, b1, w2, b2, force_kernel=True))
    out_small_d = jax.block_until_ready(net_forward(x_small, w1, b1, w2, b2))
    assert out_small_k.shape == (8, N_ACTIONS)
    assert jnp.allclose(out_small_k, ref_small, atol=1e-5, rtol=1e-5)
    assert jnp.allclose(out_small_d, ref_small, atol=1e-5, rtol=1e-5)

    # Replay/training-style batch: grid=(2,), dense (8,128)-sublane tiles.
    x_big = jax.random.normal(k2, (2048, N_STATES), jnp.float32)
    ref_big = reference_forward(x_big, w1, b1, w2, b2)
    out_big = jax.block_until_ready(net_forward(x_big, w1, b1, w2, b2))
    assert out_big.shape == (2048, N_ACTIONS)
    assert jnp.allclose(out_big, ref_big, atol=1e-5, rtol=1e-5)

    print("KERNEL_OK")
</pallas_src>

<mosaic_0001>
module attributes {stable_mosaic.version = 11 : i64} {
  func.func @net_kernel(%arg0: i32, %arg1: memref<4x1x128xf32, #tpu.memory_space<vmem>>, %arg2: memref<40xf32, #tpu.memory_space<smem>>, %arg3: memref<10xf32, #tpu.memory_space<smem>>, %arg4: memref<20xf32, #tpu.memory_space<smem>>, %arg5: memref<2xf32, #tpu.memory_space<smem>>, %arg6: memref<2x1x128xf32, #tpu.memory_space<vmem>>) attributes {dimension_semantics = [#tpu.dimension_semantics<parallel>], iteration_bounds = array<i64: 1>, scalar_prefetch = 0 : i64, scratch_operands = 0 : i64, tpu.core_type = #tpu.core_type<tc>, window_params = [{transform_indices = @transform_0, window_bounds = array<i64: 4, 1, 128>}, {transform_indices = @transform_1, window_bounds = array<i64: 40>}, {transform_indices = @transform_2, window_bounds = array<i64: 10>}, {transform_indices = @transform_3, window_bounds = array<i64: 20>}, {transform_indices = @transform_4, window_bounds = array<i64: 2>}, {transform_indices = @transform_5, window_bounds = array<i64: 2, 1, 128>}]} {
    %c0 = arith.constant 0 : index
    %c0_0 = arith.constant 0 : index
    %c0_1 = arith.constant 0 : index
    %0 = vector.load %arg1[%c0, %c0_0, %c0_1] : memref<4x1x128xf32, #tpu.memory_space<vmem>>, vector<4x1x128xf32>
    %1 = vector.extract_strided_slice %0 {offsets = [0, 0, 0], sizes = [1, 1, 128], strides = [1, 1, 1]} : vector<4x1x128xf32> to vector<1x1x128xf32>
    %2 = vector.shape_cast %1 : vector<1x1x128xf32> to vector<1x128xf32>
    %c0_2 = arith.constant 0 : index
    %3 = memref.load %arg2[%c0_2] : memref<40xf32, #tpu.memory_space<smem>>
    %4 = vector.broadcast %3 : f32 to vector<1x128xf32>
    %5 = arith.mulf %2, %4 : vector<1x128xf32>
    %6 = vector.extract_strided_slice %0 {offsets = [1, 0, 0], sizes = [1, 1, 128], strides = [1, 1, 1]} : vector<4x1x128xf32> to vector<1x1x128xf32>
    %7 = vector.shape_cast %6 : vector<1x1x128xf32> to vector<1x128xf32>
    %c10 = arith.constant 10 : index
    %8 = memref.load %arg2[%c10] : memref<40xf32, #tpu.memory_space<smem>>
    %9 = vector.broadcast %8 : f32 to vector<1x128xf32>
    %10 = arith.mulf %7, %9 : vector<1x128xf32>
    %11 = arith.addf %5, %10 : vector<1x128xf32>
    %12 = vector.extract_strided_slice %0 {offsets = [2, 0, 0], sizes = [1, 1, 128], strides = [1, 1, 1]} : vector<4x1x128xf32> to vector<1x1x128xf32>
    %13 = vector.shape_cast %12 : vector<1x1x128xf32> to vector<1x128xf32>
    %c20 = arith.constant 20 : index
    %14 = memref.load %arg2[%c20] : memref<40xf32, #tpu.memory_space<smem>>
    %15 = vector.broadcast %14 : f32 to vector<1x128xf32>
    %16 = arith.mulf %13, %15 : vector<1x128xf32>
    %17 = arith.addf %11, %16 : vector<1x128xf32>
    %18 = vector.extract_strided_slice %0 {offsets = [3, 0, 0], sizes = [1, 1, 128], strides = [1, 1, 1]} : vector<4x1x128xf32> to vector<1x1x128xf32>
    %19 = vector.shape_cast %18 : vector<1x1x128xf32> to vector<1x128xf32>
    %c30 = arith.constant 30 : index
    %20 = memref.load %arg2[%c30] : memref<40xf32, #tpu.memory_space<smem>>
    %21 = vector.broadcast %20 : f32 to vector<1x128xf32>
    %22 = arith.mulf %19, %21 : vector<1x128xf32>
    %23 = arith.addf %17, %22 : vector<1x128xf32>
    %c0_3 = arith.constant 0 : index
    %24 = memref.load %arg3[%c0_3] : memref<10xf32, #tpu.memory_space<smem>>
    %25 = vector.broadcast %24 : f32 to vector<1x128xf32>
    %26 = arith.addf %23, %25 : vector<1x128xf32>
    %cst = arith.constant 0.000000e+00 : f32
    %27 = vector.broadcast %cst : f32 to vector<1x128xf32>
    %28 = arith.maximumf %26, %27 : vector<1x128xf32>
    %c0_4 = arith.constant 0 : index
    %29 = memref.load %arg4[%c0_4] : memref<20xf32, #tpu.memory_space<smem>>
    %30 = vector.broadcast %29 : f32 to vector<1x128xf32>
    %31 = arith.mulf %28, %30 : vector<1x128xf32>
    %c1 = arith.constant 1 : index
    %32 = memref.load %arg4[%c1] : memref<20xf32, #tpu.memory_space<smem>>
    %33 = vector.broadcast %32 : f32 to vector<1x128xf32>
    %34 = arith.mulf %28, %33 : vector<1x128xf32>
    %35 = vector.extract_strided_slice %0 {offsets = [0, 0, 0], sizes = [1, 1, 128], strides = [1, 1, 1]} : vector<4x1x128xf32> to vector<1x1x128xf32>
    %36 = vector.shape_cast %35 : vector<1x1x128xf32> to vector<1x128xf32>
    %c1_5 = arith.constant 1 : index
    %37 = memref.load %arg2[%c1_5] : memref<40xf32, #tpu.memory_space<smem>>
    %38 = vector.broadcast %37 : f32 to vector<1x128xf32>
    %39 = arith.mulf %36, %38 : vector<1x128xf32>
    %40 = vector.extract_strided_slice %0 {offsets = [1, 0, 0], sizes = [1, 1, 128], strides = [1, 1, 1]} : vector<4x1x128xf32> to vector<1x1x128xf32>
    %41 = vector.shape_cast %40 : vector<1x1x128xf32> to vector<1x128xf32>
    %c11 = arith.constant 11 : index
    %42 = memref.load %arg2[%c11] : memref<40xf32, #tpu.memory_space<smem>>
    %43 = vector.broadcast %42 : f32 to vector<1x128xf32>
    %44 = arith.mulf %41, %43 : vector<1x128xf32>
    %45 = arith.addf %39, %44 : vector<1x128xf32>
    %46 = vector.extract_strided_slice %0 {offsets = [2, 0, 0], sizes = [1, 1, 128], strides = [1, 1, 1]} : vector<4x1x128xf32> to vector<1x1x128xf32>
    %47 = vector.shape_cast %46 : vector<1x1x128xf32> to vector<1x128xf32>
    %c21 = arith.constant 21 : index
    %48 = memref.load %arg2[%c21] : memref<40xf32, #tpu.memory_space<smem>>
    %49 = vector.broadcast %48 : f32 to vector<1x128xf32>
    %50 = arith.mulf %47, %49 : vector<1x128xf32>
    %51 = arith.addf %45, %50 : vector<1x128xf32>
    %52 = vector.extract_strided_slice %0 {offsets = [3, 0, 0], sizes = [1, 1, 128], strides = [1, 1, 1]} : vector<4x1x128xf32> to vector<1x1x128xf32>
    %53 = vector.shape_cast %52 : vector<1x1x128xf32> to vector<1x128xf32>
    %c31 = arith.constant 31 : index
    %54 = memref.load %arg2[%c31] : memref<40xf32, #tpu.memory_space<smem>>
    %55 = vector.broadcast %54 : f32 to vector<1x128xf32>
    %56 = arith.mulf %53, %55 : vector<1x128xf32>
    %57 = arith.addf %51, %56 : vector<1x128xf32>
    %c1_6 = arith.constant 1 : index
    %58 = memref.load %arg3[%c1_6] : memref<10xf32, #tpu.memory_space<smem>>
    %59 = vector.broadcast %58 : f32 to vector<1x128xf32>
    %60 = arith.addf %57, %59 : vector<1x128xf32>
    %cst_7 = arith.constant 0.000000e+00 : f32
    %61 = vector.broadcast %cst_7 : f32 to vector<1x128xf32>
    %62 = arith.maximumf %60, %61 : vector<1x128xf32>
    %c2 = arith.constant 2 : index
    %63 = memref.load %arg4[%c2] : memref<20xf32, #tpu.memory_space<smem>>
    %64 = vector.broadcast %63 : f32 to vector<1x128xf32>
    %65 = arith.mulf %62, %64 : vector<1x128xf32>
    %66 = arith.addf %31, %65 : vector<1x128xf32>
    %c3 = arith.constant 3 : index
    %67 = memref.load %arg4[%c3] : memref<20xf32, #tpu.memory_space<smem>>
    %68 = vector.broadcast %67 : f32 to vector<1x128xf32>
    %69 = arith.mulf %62, %68 : vector<1x128xf32>
    %70 = arith.addf %34, %69 : vector<1x128xf32>
    %71 = vector.extract_strided_slice %0 {offsets = [0, 0, 0], sizes = [1, 1, 128], strides = [1, 1, 1]} : vector<4x1x128xf32> to vector<1x1x128xf32>
    %72 = vector.shape_cast %71 : vector<1x1x128xf32> to vector<1x128xf32>
    %c2_8 = arith.constant 2 : index
    %73 = memref.load %arg2[%c2_8] : memref<40xf32, #tpu.memory_space<smem>>
    %74 = vector.broadcast %73 : f32 to vector<1x128xf32>
    %75 = arith.mulf %72, %74 : vector<1x128xf32>
    %76 = vector.extract_strided_slice %0 {offsets = [1, 0, 0], sizes = [1, 1, 128], strides = [1, 1, 1]} : vector<4x1x128xf32> to vector<1x1x128xf32>
    %77 = vector.shape_cast %76 : vector<1x1x128xf32> to vector<1x128xf32>
    %c12 = arith.constant 12 : index
    %78 = memref.load %arg2[%c12] : memref<40xf32, #tpu.memory_space<smem>>
    %79 = vector.broadcast %78 : f32 to vector<1x128xf32>
    %80 = arith.mulf %77, %79 : vector<1x128xf32>
    %81 = arith.addf %75, %80 : vector<1x128xf32>
    %82 = vector.extract_strided_slice %0 {offsets = [2, 0, 0], sizes = [1, 1, 128], strides = [1, 1, 1]} : vector<4x1x128xf32> to vector<1x1x128xf32>
    %83 = vector.shape_cast %82 : vector<1x1x128xf32> to vector<1x128xf32>
    %c22 = arith.constant 22 : index
    %84 = memref.load %arg2[%c22] : memref<40xf32, #tpu.memory_space<smem>>
    %85 = vector.broadcast %84 : f32 to vector<1x128xf32>
    %86 = arith.mulf %83, %85 : vector<1x128xf32>
    %87 = arith.addf %81, %86 : vector<1x128xf32>
    %88 = vector.extract_strided_slice %0 {offsets = [3, 0, 0], sizes = [1, 1, 128], strides = [1, 1, 1]} : vector<4x1x128xf32> to vector<1x1x128xf32>
    %89 = vector.shape_cast %88 : vector<1x1x128xf32> to vector<1x128xf32>
    %c32 = arith.constant 32 : index
    %90 = memref.load %arg2[%c32] : memref<40xf32, #tpu.memory_space<smem>>
    %91 = vector.broadcast %90 : f32 to vector<1x128xf32>
    %92 = arith.mulf %89, %91 : vector<1x128xf32>
    %93 = arith.addf %87, %92 : vector<1x128xf32>
    %c2_9 = arith.constant 2 : index
    %94 = memref.load %arg3[%c2_9] : memref<10xf32, #tpu.memory_space<smem>>
    %95 = vector.broadcast %94 : f32 to vector<1x128xf32>
    %96 = arith.addf %93, %95 : vector<1x128xf32>
    %cst_10 = arith.constant 0.000000e+00 : f32
    %97 = vector.broadcast %cst_10 : f32 to vector<1x128xf32>
    %98 = arith.maximumf %96, %97 : vector<1x128xf32>
    %c4 = arith.constant 4 : index
    %99 = memref.load %arg4[%c4] : memref<20xf32, #tpu.memory_space<smem>>
    %100 = vector.broadcast %99 : f32 to vector<1x128xf32>
    %101 = arith.mulf %98, %100 : vector<1x128xf32>
    %102 = arith.addf %66, %101 : vector<1x128xf32>
    %c5 = arith.constant 5 : index
    %103 = memref.load %arg4[%c5] : memref<20xf32, #tpu.memory_space<smem>>
    %104 = vector.broadcast %103 : f32 to vector<1x128xf32>
    %105 = arith.mulf %98, %104 : vector<1x128xf32>
    %106 = arith.addf %70, %105 : vector<1x128xf32>
    %107 = vector.extract_strided_slice %0 {offsets = [0, 0, 0], sizes = [1, 1, 128], strides = [1, 1, 1]} : vector<4x1x128xf32> to vector<1x1x128xf32>
    %108 = vector.shape_cast %107 : vector<1x1x128xf32> to vector<1x128xf32>
    %c3_11 = arith.constant 3 : index
    %109 = memref.load %arg2[%c3_11] : memref<40xf32, #tpu.memory_space<smem>>
    %110 = vector.broadcast %109 : f32 to vector<1x128xf32>
    %111 = arith.mulf %108, %110 : vector<1x128xf32>
    %112 = vector.extract_strided_slice %0 {offsets = [1, 0, 0], sizes = [1, 1, 128], strides = [1, 1, 1]} : vector<4x1x128xf32> to vector<1x1x128xf32>
    %113 = vector.shape_cast %112 : vector<1x1x128xf32> to vector<1x128xf32>
    %c13 = arith.constant 13 : index
    %114 = memref.load %arg2[%c13] : memref<40xf32, #tpu.memory_space<smem>>
    %115 = vector.broadcast %114 : f32 to vector<1x128xf32>
    %116 = arith.mulf %113, %115 : vector<1x128xf32>
    %117 = arith.addf %111, %116 : vector<1x128xf32>
    %118 = vector.extract_strided_slice %0 {offsets = [2, 0, 0], sizes = [1, 1, 128], strides = [1, 1, 1]} : vector<4x1x128xf32> to vector<1x1x128xf32>
    %119 = vector.shape_cast %118 : vector<1x1x128xf32> to vector<1x128xf32>
    %c23 = arith.constant 23 : index
    %120 = memref.load %arg2[%c23] : memref<40xf32, #tpu.memory_space<smem>>
    %121 = vector.broadcast %120 : f32 to vector<1x128xf32>
    %122 = arith.mulf %119, %121 : vector<1x128xf32>
    %123 = arith.addf %117, %122 : vector<1x128xf32>
    %124 = vector.extract_strided_slice %0 {offsets = [3, 0, 0], sizes = [1, 1, 128], strides = [1, 1, 1]} : vector<4x1x128xf32> to vector<1x1x128xf32>
    %125 = vector.shape_cast %124 : vector<1x1x128xf32> to vector<1x128xf32>
    %c33 = arith.constant 33 : index
    %126 = memref.load %arg2[%c33] : memref<40xf32, #tpu.memory_space<smem>>
    %127 = vector.broadcast %126 : f32 to vector<1x128xf32>
    %128 = arith.mulf %125, %127 : vector<1x128xf32>
    %129 = arith.addf %123, %128 : vector<1x128xf32>
    %c3_12 = arith.constant 3 : index
    %130 = memref.load %arg3[%c3_12] : memref<10xf32, #tpu.memory_space<smem>>
    %131 = vector.broadcast %130 : f32 to vector<1x128xf32>
    %132 = arith.addf %129, %131 : vector<1x128xf32>
    %cst_13 = arith.constant 0.000000e+00 : f32
    %133 = vector.broadcast %cst_13 : f32 to vector<1x128xf32>
    %134 = arith.maximumf %132, %133 : vector<1x128xf32>
    %c6 = arith.constant 6 : index
    %135 = memref.load %arg4[%c6] : memref<20xf32, #tpu.memory_space<smem>>
    %136 = vector.broadcast %135 : f32 to vector<1x128xf32>
    %137 = arith.mulf %134, %136 : vector<1x128xf32>
    %138 = arith.addf %102, %137 : vector<1x128xf32>
    %c7 = arith.constant 7 : index
    %139 = memref.load %arg4[%c7] : memref<20xf32, #tpu.memory_space<smem>>
    %140 = vector.broadcast %139 : f32 to vector<1x128xf32>
    %141 = arith.mulf %134, %140 : vector<1x128xf32>
    %142 = arith.addf %106, %141 : vector<1x128xf32>
    %143 = vector.extract_strided_slice %0 {offsets = [0, 0, 0], sizes = [1, 1, 128], strides = [1, 1, 1]} : vector<4x1x128xf32> to vector<1x1x128xf32>
    %144 = vector.shape_cast %143 : vector<1x1x128xf32> to vector<1x128xf32>
    %c4_14 = arith.constant 4 : index
    %145 = memref.load %arg2[%c4_14] : memref<40xf32, #tpu.memory_space<smem>>
    %146 = vector.broadcast %145 : f32 to vector<1x128xf32>
    %147 = arith.mulf %144, %146 : vector<1x128xf32>
    %148 = vector.extract_strided_slice %0 {offsets = [1, 0, 0], sizes = [1, 1, 128], strides = [1, 1, 1]} : vector<4x1x128xf32> to vector<1x1x128xf32>
    %149 = vector.shape_cast %148 : vector<1x1x128xf32> to vector<1x128xf32>
    %c14 = arith.constant 14 : index
    %150 = memref.load %arg2[%c14] : memref<40xf32, #tpu.memory_space<smem>>
    %151 = vector.broadcast %150 : f32 to vector<1x128xf32>
    %152 = arith.mulf %149, %151 : vector<1x128xf32>
    %153 = arith.addf %147, %152 : vector<1x128xf32>
    %154 = vector.extract_strided_slice %0 {offsets = [2, 0, 0], sizes = [1, 1, 128], strides = [1, 1, 1]} : vector<4x1x128xf32> to vector<1x1x128xf32>
    %155 = vector.shape_cast %154 : vector<1x1x128xf32> to vector<1x128xf32>
    %c24 = arith.constant 24 : index
    %156 = memref.load %arg2[%c24] : memref<40xf32, #tpu.memory_space<smem>>
    %157 = vector.broadcast %156 : f32 to vector<1x128xf32>
    %158 = arith.mulf %155, %157 : vector<1x128xf32>
    %159 = arith.addf %153, %158 : vector<1x128xf32>
    %160 = vector.extract_strided_slice %0 {offsets = [3, 0, 0], sizes = [1, 1, 128], strides = [1, 1, 1]} : vector<4x1x128xf32> to vector<1x1x128xf32>
    %161 = vector.shape_cast %160 : vector<1x1x128xf32> to vector<1x128xf32>
    %c34 = arith.constant 34 : index
    %162 = memref.load %arg2[%c34] : memref<40xf32, #tpu.memory_space<smem>>
    %163 = vector.broadcast %162 : f32 to vector<1x128xf32>
    %164 = arith.mulf %161, %163 : vector<1x128xf32>
    %165 = arith.addf %159, %164 : vector<1x128xf32>
    %c4_15 = arith.constant 4 : index
    %166 = memref.load %arg3[%c4_15] : memref<10xf32, #tpu.memory_space<smem>>
    %167 = vector.broadcast %166 : f32 to vector<1x128xf32>
    %168 = arith.addf %165, %167 : vector<1x128xf32>
    %cst_16 = arith.constant 0.000000e+00 : f32
    %169 = vector.broadcast %cst_16 : f32 to vector<1x128xf32>
    %170 = arith.maximumf %168, %169 : vector<1x128xf32>
    %c8 = arith.constant 8 : index
    %171 = memref.load %arg4[%c8] : memref<20xf32, #tpu.memory_space<smem>>
    %172 = vector.broadcast %171 : f32 to vector<1x128xf32>
    %173 = arith.mulf %170, %172 : vector<1x128xf32>
    %174 = arith.addf %138, %173 : vector<1x128xf32>
    %c9 = arith.constant 9 : index
    %175 = memref.load %arg4[%c9] : memref<20xf32, #tpu.memory_space<smem>>
    %176 = vector.broadcast %175 : f32 to vector<1x128xf32>
    %177 = arith.mulf %170, %176 : vector<1x128xf32>
    %178 = arith.addf %142, %177 : vector<1x128xf32>
    %179 = vector.extract_strided_slice %0 {offsets = [0, 0, 0], sizes = [1, 1, 128], strides = [1, 1, 1]} : vector<4x1x128xf32> to vector<1x1x128xf32>
    %180 = vector.shape_cast %179 : vector<1x1x128xf32> to vector<1x128xf32>
    %c5_17 = arith.constant 5 : index
    %181 = memref.load %arg2[%c5_17] : memref<40xf32, #tpu.memory_space<smem>>
    %182 = vector.broadcast %181 : f32 to vector<1x128xf32>
    %183 = arith.mulf %180, %182 : vector<1x128xf32>
    %184 = vector.extract_strided_slice %0 {offsets = [1, 0, 0], sizes = [1, 1, 128], strides = [1, 1, 1]} : vector<4x1x128xf32> to vector<1x1x128xf32>
    %185 = vector.shape_cast %184 : vector<1x1x128xf32> to vector<1x128xf32>
    %c15 = arith.constant 15 : index
    %186 = memref.load %arg2[%c15] : memref<40xf32, #tpu.memory_space<smem>>
    %187 = vector.broadcast %186 : f32 to vector<1x128xf32>
    %188 = arith.mulf %185, %187 : vector<1x128xf32>
    %189 = arith.addf %183, %188 : vector<1x128xf32>
    %190 = vector.extract_strided_slice %0 {offsets = [2, 0, 0], sizes = [1, 1, 128], strides = [1, 1, 1]} : vector<4x1x128xf32> to vector<1x1x128xf32>
    %191 = vector.shape_cast %190 : vector<1x1x128xf32> to vector<1x128xf32>
    %c25 = arith.constant 25 : index
    %192 = memref.load %arg2[%c25] : memref<40xf32, #tpu.memory_space<smem>>
    %193 = vector.broadcast %192 : f32 to vector<1x128xf32>
    %194 = arith.mulf %191, %193 : vector<1x128xf32>
    %195 = arith.addf %189, %194 : vector<1x128xf32>
    %196 = vector.extract_strided_slice %0 {offsets = [3, 0, 0], sizes = [1, 1, 128], strides = [1, 1, 1]} : vector<4x1x128xf32> to vector<1x1x128xf32>
    %197 = vector.shape_cast %196 : vector<1x1x128xf32> to vector<1x128xf32>
    %c35 = arith.constant 35 : index
    %198 = memref.load %arg2[%c35] : memref<40xf32, #tpu.memory_space<smem>>
    %199 = vector.broadcast %198 : f32 to vector<1x128xf32>
    %200 = arith.mulf %197, %199 : vector<1x128xf32>
    %201 = arith.addf %195, %200 : vector<1x128xf32>
    %c5_18 = arith.constant 5 : index
    %202 = memref.load %arg3[%c5_18] : memref<10xf32, #tpu.memory_space<smem>>
    %203 = vector.broadcast %202 : f32 to vector<1x128xf32>
    %204 = arith.addf %201, %203 : vector<1x128xf32>
    %cst_19 = arith.constant 0.000000e+00 : f32
    %205 = vector.broadcast %cst_19 : f32 to vector<1x128xf32>
    %206 = arith.maximumf %204, %205 : vector<1x128xf32>
    %c10_20 = arith.constant 10 : index
    %207 = memref.load %arg4[%c10_20] : memref<20xf32, #tpu.memory_space<smem>>
    %208 = vector.broadcast %207 : f32 to vector<1x128xf32>
    %209 = arith.mulf %206, %208 : vector<1x128xf32>
    %210 = arith.addf %174, %209 : vector<1x128xf32>
    %c11_21 = arith.constant 11 : index
    %211 = memref.load %arg4[%c11_21] : memref<20xf32, #tpu.memory_space<smem>>
    %212 = vector.broadcast %211 : f32 to vector<1x128xf32>
    %213 = arith.mulf %206, %212 : vector<1x128xf32>
    %214 = arith.addf %178, %213 : vector<1x128xf32>
    %215 = vector.extract_strided_slice %0 {offsets = [0, 0, 0], sizes = [1, 1, 128], strides = [1, 1, 1]} : vector<4x1x128xf32> to vector<1x1x128xf32>
    %216 = vector.shape_cast %215 : vector<1x1x128xf32> to vector<1x128xf32>
    %c6_22 = arith.constant 6 : index
    %217 = memref.load %arg2[%c6_22] : memref<40xf32, #tpu.memory_space<smem>>
    %218 = vector.broadcast %217 : f32 to vector<1x128xf32>
    %219 = arith.mulf %216, %218 : vector<1x128xf32>
    %220 = vector.extract_strided_slice %0 {offsets = [1, 0, 0], sizes = [1, 1, 128], strides = [1, 1, 1]} : vector<4x1x128xf32> to vector<1x1x128xf32>
    %221 = vector.shape_cast %220 : vector<1x1x128xf32> to vector<1x128xf32>
    %c16 = arith.constant 16 : index
    %222 = memref.load %arg2[%c16] : memref<40xf32, #tpu.memory_space<smem>>
    %223 = vector.broadcast %222 : f32 to vector<1x128xf32>
    %224 = arith.mulf %221, %223 : vector<1x128xf32>
    %225 = arith.addf %219, %224 : vector<1x128xf32>
    %226 = vector.extract_strided_slice %0 {offsets = [2, 0, 0], sizes = [1, 1, 128], strides = [1, 1, 1]} : vector<4x1x128xf32> to vector<1x1x128xf32>
    %227 = vector.shape_cast %226 : vector<1x1x128xf32> to vector<1x128xf32>
    %c26 = arith.constant 26 : index
    %228 = memref.load %arg2[%c26] : memref<40xf32, #tpu.memory_space<smem>>
    %229 = vector.broadcast %228 : f32 to vector<1x128xf32>
    %230 = arith.mulf %227, %229 : vector<1x128xf32>
    %231 = arith.addf %225, %230 : vector<1x128xf32>
    %232 = vector.extract_strided_slice %0 {offsets = [3, 0, 0], sizes = [1, 1, 128], strides = [1, 1, 1]} : vector<4x1x128xf32> to vector<1x1x128xf32>
    %233 = vector.shape_cast %232 : vector<1x1x128xf32> to vector<1x128xf32>
    %c36 = arith.constant 36 : index
    %234 = memref.load %arg2[%c36] : memref<40xf32, #tpu.memory_space<smem>>
    %235 = vector.broadcast %234 : f32 to vector<1x128xf32>
    %236 = arith.mulf %233, %235 : vector<1x128xf32>
    %237 = arith.addf %231, %236 : vector<1x128xf32>
    %c6_23 = arith.constant 6 : index
    %238 = memref.load %arg3[%c6_23] : memref<10xf32, #tpu.memory_space<smem>>
    %239 = vector.broadcast %238 : f32 to vector<1x128xf32>
    %240 = arith.addf %237, %239 : vector<1x128xf32>
    %cst_24 = arith.constant 0.000000e+00 : f32
    %241 = vector.broadcast %cst_24 : f32 to vector<1x128xf32>
    %242 = arith.maximumf %240, %241 : vector<1x128xf32>
    %c12_25 = arith.constant 12 : index
    %243 = memref.load %arg4[%c12_25] : memref<20xf32, #tpu.memory_space<smem>>
    %244 = vector.broadcast %243 : f32 to vector<1x128xf32>
    %245 = arith.mulf %242, %244 : vector<1x128xf32>
    %246 = arith.addf %210, %245 : vector<1x128xf32>
    %c13_26 = arith.constant 13 : index
    %247 = memref.load %arg4[%c13_26] : memref<20xf32, #tpu.memory_space<smem>>
    %248 = vector.broadcast %247 : f32 to vector<1x128xf32>
    %249 = arith.mulf %242, %248 : vector<1x128xf32>
    %250 = arith.addf %214, %249 : vector<1x128xf32>
    %251 = vector.extract_strided_slice %0 {offsets = [0, 0, 0], sizes = [1, 1, 128], strides = [1, 1, 1]} : vector<4x1x128xf32> to vector<1x1x128xf32>
    %252 = vector.shape_cast %251 : vector<1x1x128xf32> to vector<1x128xf32>
    %c7_27 = arith.constant 7 : index
    %253 = memref.load %arg2[%c7_27] : memref<40xf32, #tpu.memory_space<smem>>
    %254 = vector.broadcast %253 : f32 to vector<1x128xf32>
    %255 = arith.mulf %252, %254 : vector<1x128xf32>
    %256 = vector.extract_strided_slice %0 {offsets = [1, 0, 0], sizes = [1, 1, 128], strides = [1, 1, 1]} : vector<4x1x128xf32> to vector<1x1x128xf32>
    %257 = vector.shape_cast %256 : vector<1x1x128xf32> to vector<1x128xf32>
    %c17 = arith.constant 17 : index
    %258 = memref.load %arg2[%c17] : memref<40xf32, #tpu.memory_space<smem>>
    %259 = vector.broadcast %258 : f32 to vector<1x128xf32>
    %260 = arith.mulf %257, %259 : vector<1x128xf32>
    %261 = arith.addf %255, %260 : vector<1x128xf32>
    %262 = vector.extract_strided_slice %0 {offsets = [2, 0, 0], sizes = [1, 1, 128], strides = [1, 1, 1]} : vector<4x1x128xf32> to vector<1x1x128xf32>
    %263 = vector.shape_cast %262 : vector<1x1x128xf32> to vector<1x128xf32>
    %c27 = arith.constant 27 : index
    %264 = memref.load %arg2[%c27] : memref<40xf32, #tpu.memory_space<smem>>
    %265 = vector.broadcast %264 : f32 to vector<1x128xf32>
    %266 = arith.mulf %263, %265 : vector<1x128xf32>
    %267 = arith.addf %261, %266 : vector<1x128xf32>
    %268 = vector.extract_strided_slice %0 {offsets = [3, 0, 0], sizes = [1, 1, 128], strides = [1, 1, 1]} : vector<4x1x128xf32> to vector<1x1x128xf32>
    %269 = vector.shape_cast %268 : vector<1x1x128xf32> to vector<1x128xf32>
    %c37 = arith.constant 37 : index
    %270 = memref.load %arg2[%c37] : memref<40xf32, #tpu.memory_space<smem>>
    %271 = vector.broadcast %270 : f32 to vector<1x128xf32>
    %272 = arith.mulf %269, %271 : vector<1x128xf32>
    %273 = arith.addf %267, %272 : vector<1x128xf32>
    %c7_28 = arith.constant 7 : index
    %274 = memref.load %arg3[%c7_28] : memref<10xf32, #tpu.memory_space<smem>>
    %275 = vector.broadcast %274 : f32 to vector<1x128xf32>
    %276 = arith.addf %273, %275 : vector<1x128xf32>
    %cst_29 = arith.constant 0.000000e+00 : f32
    %277 = vector.broadcast %cst_29 : f32 to vector<1x128xf32>
    %278 = arith.maximumf %276, %277 : vector<1x128xf32>
    %c14_30 = arith.constant 14 : index
    %279 = memref.load %arg4[%c14_30] : memref<20xf32, #tpu.memory_space<smem>>
    %280 = vector.broadcast %279 : f32 to vector<1x128xf32>
    %281 = arith.mulf %278, %280 : vector<1x128xf32>
    %282 = arith.addf %246, %281 : vector<1x128xf32>
    %c15_31 = arith.constant 15 : index
    %283 = memref.load %arg4[%c15_31] : memref<20xf32, #tpu.memory_space<smem>>
    %284 = vector.broadcast %283 : f32 to vector<1x128xf32>
    %285 = arith.mulf %278, %284 : vector<1x128xf32>
    %286 = arith.addf %250, %285 : vector<1x128xf32>
    %287 = vector.extract_strided_slice %0 {offsets = [0, 0, 0], sizes = [1, 1, 128], strides = [1, 1, 1]} : vector<4x1x128xf32> to vector<1x1x128xf32>
    %288 = vector.shape_cast %287 : vector<1x1x128xf32> to vector<1x128xf32>
    %c8_32 = arith.constant 8 : index
    %289 = memref.load %arg2[%c8_32] : memref<40xf32, #tpu.memory_space<smem>>
    %290 = vector.broadcast %289 : f32 to vector<1x128xf32>
    %291 = arith.mulf %288, %290 : vector<1x128xf32>
    %292 = vector.extract_strided_slice %0 {offsets = [1, 0, 0], sizes = [1, 1, 128], strides = [1, 1, 1]} : vector<4x1x128xf32> to vector<1x1x128xf32>
    %293 = vector.shape_cast %292 : vector<1x1x128xf32> to vector<1x128xf32>
    %c18 = arith.constant 18 : index
    %294 = memref.load %arg2[%c18] : memref<40xf32, #tpu.memory_space<smem>>
    %295 = vector.broadcast %294 : f32 to vector<1x128xf32>
    %296 = arith.mulf %293, %295 : vector<1x128xf32>
    %297 = arith.addf %291, %296 : vector<1x128xf32>
    %298 = vector.extract_strided_slice %0 {offsets = [2, 0, 0], sizes = [1, 1, 128], strides = [1, 1, 1]} : vector<4x1x128xf32> to vector<1x1x128xf32>
    %299 = vector.shape_cast %298 : vector<1x1x128xf32> to vector<1x128xf32>
    %c28 = arith.constant 28 : index
    %300 = memref.load %arg2[%c28] : memref<40xf32, #tpu.memory_space<smem>>
    %301 = vector.broadcast %300 : f32 to vector<1x128xf32>
    %302 = arith.mulf %299, %301 : vector<1x128xf32>
    %303 = arith.addf %297, %302 : vector<1x128xf32>
    %304 = vector.extract_strided_slice %0 {offsets = [3, 0, 0], sizes = [1, 1, 128], strides = [1, 1, 1]} : vector<4x1x128xf32> to vector<1x1x128xf32>
    %305 = vector.shape_cast %304 : vector<1x1x128xf32> to vector<1x128xf32>
    %c38 = arith.constant 38 : index
    %306 = memref.load %arg2[%c38] : memref<40xf32, #tpu.memory_space<smem>>
    %307 = vector.broadcast %306 : f32 to vector<1x128xf32>
    %308 = arith.mulf %305, %307 : vector<1x128xf32>
    %309 = arith.addf %303, %308 : vector<1x128xf32>
    %c8_33 = arith.constant 8 : index
    %310 = memref.load %arg3[%c8_33] : memref<10xf32, #tpu.memory_space<smem>>
    %311 = vector.broadcast %310 : f32 to vector<1x128xf32>
    %312 = arith.addf %309, %311 : vector<1x128xf32>
    %cst_34 = arith.constant 0.000000e+00 : f32
    %313 = vector.broadcast %cst_34 : f32 to vector<1x128xf32>
    %314 = arith.maximumf %312, %313 : vector<1x128xf32>
    %c16_35 = arith.constant 16 : index
    %315 = memref.load %arg4[%c16_35] : memref<20xf32, #tpu.memory_space<smem>>
    %316 = vector.broadcast %315 : f32 to vector<1x128xf32>
    %317 = arith.mulf %314, %316 : vector<1x128xf32>
    %318 = arith.addf %282, %317 : vector<1x128xf32>
    %c17_36 = arith.constant 17 : index
    %319 = memref.load %arg4[%c17_36] : memref<20xf32, #tpu.memory_space<smem>>
    %320 = vector.broadcast %319 : f32 to vector<1x128xf32>
    %321 = arith.mulf %314, %320 : vector<1x128xf32>
    %322 = arith.addf %286, %321 : vector<1x128xf32>
    %323 = vector.extract_strided_slice %0 {offsets = [0, 0, 0], sizes = [1, 1, 128], strides = [1, 1, 1]} : vector<4x1x128xf32> to vector<1x1x128xf32>
    %324 = vector.shape_cast %323 : vector<1x1x128xf32> to vector<1x128xf32>
    %c9_37 = arith.constant 9 : index
    %325 = memref.load %arg2[%c9_37] : memref<40xf32, #tpu.memory_space<smem>>
    %326 = vector.broadcast %325 : f32 to vector<1x128xf32>
    %327 = arith.mulf %324, %326 : vector<1x128xf32>
    %328 = vector.extract_strided_slice %0 {offsets = [1, 0, 0], sizes = [1, 1, 128], strides = [1, 1, 1]} : vector<4x1x128xf32> to vector<1x1x128xf32>
    %329 = vector.shape_cast %328 : vector<1x1x128xf32> to vector<1x128xf32>
    %c19 = arith.constant 19 : index
    %330 = memref.load %arg2[%c19] : memref<40xf32, #tpu.memory_space<smem>>
    %331 = vector.broadcast %330 : f32 to vector<1x128xf32>
    %332 = arith.mulf %329, %331 : vector<1x128xf32>
    %333 = arith.addf %327, %332 : vector<1x128xf32>
    %334 = vector.extract_strided_slice %0 {offsets = [2, 0, 0], sizes = [1, 1, 128], strides = [1, 1, 1]} : vector<4x1x128xf32> to vector<1x1x128xf32>
    %335 = vector.shape_cast %334 : vector<1x1x128xf32> to vector<1x128xf32>
    %c29 = arith.constant 29 : index
    %336 = memref.load %arg2[%c29] : memref<40xf32, #tpu.memory_space<smem>>
    %337 = vector.broadcast %336 : f32 to vector<1x128xf32>
    %338 = arith.mulf %335, %337 : vector<1x128xf32>
    %339 = arith.addf %333, %338 : vector<1x128xf32>
    %340 = vector.extract_strided_slice %0 {offsets = [3, 0, 0], sizes = [1, 1, 128], strides = [1, 1, 1]} : vector<4x1x128xf32> to vector<1x1x128xf32>
    %341 = vector.shape_cast %340 : vector<1x1x128xf32> to vector<1x128xf32>
    %c39 = arith.constant 39 : index
    %342 = memref.load %arg2[%c39] : memref<40xf32, #tpu.memory_space<smem>>
    %343 = vector.broadcast %342 : f32 to vector<1x128xf32>
    %344 = arith.mulf %341, %343 : vector<1x128xf32>
    %345 = arith.addf %339, %344 : vector<1x128xf32>
    %c9_38 = arith.constant 9 : index
    %346 = memref.load %arg3[%c9_38] : memref<10xf32, #tpu.memory_space<smem>>
    %347 = vector.broadcast %346 : f32 to vector<1x128xf32>
    %348 = arith.addf %345, %347 : vector<1x128xf32>
    %cst_39 = arith.constant 0.000000e+00 : f32
    %349 = vector.broadcast %cst_39 : f32 to vector<1x128xf32>
    %350 = arith.maximumf %348, %349 : vector<1x128xf32>
    %c18_40 = arith.constant 18 : index
    %351 = memref.load %arg4[%c18_40] : memref<20xf32, #tpu.memory_space<smem>>
    %352 = vector.broadcast %351 : f32 to vector<1x128xf32>
    %353 = arith.mulf %350, %352 : vector<1x128xf32>
    %354 = arith.addf %318, %353 : vector<1x128xf32>
    %c19_41 = arith.constant 19 : index
    %355 = memref.load %arg4[%c19_41] : memref<20xf32, #tpu.memory_space<smem>>
    %356 = vector.broadcast %355 : f32 to vector<1x128xf32>
    %357 = arith.mulf %350, %356 : vector<1x128xf32>
    %358 = arith.addf %322, %357 : vector<1x128xf32>
    %c0_42 = arith.constant 0 : index
    %359 = memref.load %arg5[%c0_42] : memref<2xf32, #tpu.memory_space<smem>>
    %360 = vector.broadcast %359 : f32 to vector<1x128xf32>
    %361 = arith.addf %354, %360 : vector<1x128xf32>
    %c0_43 = arith.constant 0 : index
    %c0_44 = arith.constant 0 : index
    %c0_45 = arith.constant 0 : index
    %362 = vector.load %arg6[%c0_43, %c0_44, %c0_45] : memref<2x1x128xf32, #tpu.memory_space<vmem>>, vector<1x1x128xf32>
    %363 = vector.shape_cast %362 : vector<1x1x128xf32> to vector<1x128xf32>
    %364 = vector.shape_cast %361 : vector<1x128xf32> to vector<1x1x128xf32>
    tpu.vector_store %arg6[%c0_43, %c0_44, %c0_45], %364 {strides = array<i32>} : memref<2x1x128xf32, #tpu.memory_space<vmem>>, vector<1x1x128xf32>,
    %c1_46 = arith.constant 1 : index
    %365 = memref.load %arg5[%c1_46] : memref<2xf32, #tpu.memory_space<smem>>
    %366 = vector.broadcast %365 : f32 to vector<1x128xf32>
    %367 = arith.addf %358, %366 : vector<1x128xf32>
    %c1_47 = arith.constant 1 : index
    %c0_48 = arith.constant 0 : index
    %c0_49 = arith.constant 0 : index
    %368 = vector.load %arg6[%c1_47, %c0_48, %c0_49] : memref<2x1x128xf32, #tpu.memory_space<vmem>>, vector<1x1x128xf32>
    %369 = vector.shape_cast %368 : vector<1x1x128xf32> to vector<1x128xf32>
    %370 = vector.shape_cast %367 : vector<1x128xf32> to vector<1x1x128xf32>
    tpu.vector_store %arg6[%c1_47, %c0_48, %c0_49], %370 {strides = array<i32>} : memref<2x1x128xf32, #tpu.memory_space<vmem>>, vector<1x1x128xf32>,
    return
  }
  func.func @transform_0(%arg0: i32) -> (i32, i32, i32) {
    %c0_i32 = arith.constant 0 : i32
    %c0_i32_0 = arith.constant 0 : i32
    %c0_i32_1 = arith.constant 0 : i32
    return %c0_i32, %arg0, %c0_i32_0 : i32, i32, i32
  }
  func.func @transform_1(%arg0: i32) -> i32 {
    %c0_i32 = arith.constant 0 : i32
    %c0_i32_0 = arith.constant 0 : i32
    return %c0_i32 : i32
  }
  func.func @transform_2(%arg0: i32) -> i32 {
    %c0_i32 = arith.constant 0 : i32
    %c0_i32_0 = arith.constant 0 : i32
    return %c0_i32 : i32
  }
  func.func @transform_3(%arg0: i32) -> i32 {
    %c0_i32 = arith.constant 0 : i32
    %c0_i32_0 = arith.constant 0 : i32
    return %c0_i32 : i32
  }
  func.func @transform_4(%arg0: i32) -> i32 {
    %c0_i32 = arith.constant 0 : i32
    %c0_i32_0 = arith.constant 0 : i32
    return %c0_i32 : i32
  }
  func.func @transform_5(%arg0: i32) -> (i32, i32, i32) {
    %c0_i32 = arith.constant 0 : i32
    %c0_i32_0 = arith.constant 0 : i32
    %c0_i32_1 = arith.constant 0 : i32
    return %c0_i32, %arg0, %c0_i32_0 : i32, i32, i32
  }
}

</mosaic_0001>

<llo_original>
// kernel: net_forward.1
$region0: #{net_forward.1}
  #allocation0 [shape = 'u32[]', space=smem, size = 0x4, offset = 0x4, fixed_abs, tag = 'smem constant byte address 0x4 - core index']
  #allocation1 [shape = 'u32[72,128]{1,0:T(1,128)}', space=vmem, size = 0x9000, scoped, tag = 'internal scratch']
  %s0 = inlined_call_operand.vmem [shape: f32[4,1,128], index: 0, kind: input, shape index: {}]
  %s1 = inlined_call_operand.vmem [shape: f32[40], index: 1, kind: input, shape index: {}]
  %s2 = inlined_call_operand.vmem [shape: f32[10], index: 2, kind: input, shape index: {}]
  %s3 = inlined_call_operand.vmem [shape: f32[20], index: 3, kind: input, shape index: {}]
  %s4 = inlined_call_operand.vmem [shape: f32[2], index: 4, kind: input, shape index: {}]
  %s5 = inlined_call_operand.vmem [shape: f32[2,1,128], index: 5, kind: output, shape index: {}]
  %s6 = sld [smem:[#allocation0]]
  $region46: #{net_forward.1} parent=0
    _
  %s8 = ssub.s32 1, %s6
  %s9 = scalar_select 0, %s8, %s6
  $region1: #{net_forward.1} parent=0
    #allocation2 [shape = 'u8[512]{0}', space=smem, size = 0x200, scoped, tag = 'input window, operand 1, single buffered']
    #allocation3 [shape = 's32[1]{0}', space=sflag, size = 0x4, scoped, tag = 'scoped memory for net_forward.1']
    #allocation4 [shape = 'u8[512]{0}', space=smem, size = 0x200, scoped, tag = 'input window, operand 2, single buffered']
    #allocation5 [shape = 's32[1]{0}', space=sflag, size = 0x4, scoped, tag = 'scoped memory for net_forward.1']
    #allocation6 [shape = 'u8[512]{0}', space=smem, size = 0x200, scoped, tag = 'input window, operand 3, single buffered']
    #allocation7 [shape = 'u8[512]{0}', space=smem, size = 0x200, scoped, tag = 'input window, operand 4, single buffered']
    #allocation8 [shape = 's32[1]{0}', space=sflag, size = 0x4, scoped, tag = 'scoped memory for net_forward.1']
    %10 = vsyncpa [#allocation3], 0
    %11 = vsyncpa [#allocation5], 0
    %12 = vsyncpa [#allocation8], 0
    // Predicated region
    $region2: #{net_forward.1} parent=1 // pred_check
      _
    $region3: #{net_forward.1} parent=1 // pred_check_branch
      %14 = sbr.rel (0) target = $region5
    $region4: #{net_forward.1} parent=1 // pred_region
      _
    $region5: #{net_forward.1} parent=1 // pred_fallthru
      _
    // Predicated region
    $region6: #{net_forward.1} parent=1 // pred_check
      _
    $region7: #{net_forward.1} parent=1 // pred_check_branch
      %16 = sbr.rel (0) target = $region9
    $region8: #{net_forward.1} parent=1 // pred_region
      %18 = vsyncadd [#allocation3], 0
      %s20 = sshll.u32 %s1, 4
      %s21 = int_to_ptr.vmem [resolvable:$true] %s20
      %23 = dma.vmem_to_smem %s21, 16, [#allocation2], [#allocation3]
    $region9: #{net_forward.1} parent=1 // pred_fallthru
      _
    // Predicated region
    $region10: #{net_forward.1} parent=1 // pred_check
      _
    $region11: #{net_forward.1} parent=1 // pred_check_branch
      %25 = sbr.rel (0) target = $region13
    $region12: #{net_forward.1} parent=1 // pred_region
      %27 = vsyncadd [#allocation5], 0
      %s29 = sshll.u32 %s2, 4
      %s30 = int_to_ptr.vmem [resolvable:$true] %s29
      %32 = dma.vmem_to_smem %s30, 16, [#allocation4], [#allocation5]
    $region13: #{net_forward.1} parent=1 // pred_fallthru
      _
    // Predicated region
    $region14: #{net_forward.1} parent=1 // pred_check
      _
    $region15: #{net_forward.1} parent=1 // pred_check_branch
      %34 = sbr.rel (0) target = $region17
    $region16: #{net_forward.1} parent=1 // pred_region
      %36 = vsyncadd [#allocation5], 0
      %s38 = sshll.u32 %s3, 4
      %s39 = int_to_ptr.vmem [resolvable:$true] %s38
      %41 = dma.vmem_to_smem %s39, 16, [#allocation6], [#allocation5]
    $region17: #{net_forward.1} parent=1 // pred_fallthru
      _
    // Predicated region
    $region18: #{net_forward.1} parent=1 // pred_check
      _
    $region19: #{net_forward.1} parent=1 // pred_check_branch
      %43 = sbr.rel (0) target = $region21
    $region20: #{net_forward.1} parent=1 // pred_region
      %45 = vsyncadd [#allocation8], 0
      %s47 = sshll.u32 %s4, 4
      %s48 = int_to_ptr.vmem [resolvable:$true] %s47
      %50 = dma.vmem_to_smem %s48, 16, [#allocation7], [#allocation8]
    $region21: #{net_forward.1} parent=1 // pred_fallthru
      _
    // Predicated region
    $region22: #{net_forward.1} parent=1 // pred_check
      _
    $region23: #{net_forward.1} parent=1 // pred_check_branch
      %52 = sbr.rel (0) target = $region25
    $region24: #{net_forward.1} parent=1 // pred_region
      %54 = dma.done [#allocation3], 16
    $region25: #{net_forward.1} parent=1 // pred_fallthru
      _
    // Predicated region
    $region26: #{net_forward.1} parent=1 // pred_check
      _
    $region27: #{net_forward.1} parent=1 // pred_check_branch
      %56 = sbr.rel (0) target = $region29
    $region28: #{net_forward.1} parent=1 // pred_region
      %58 = dma.done [#allocation5], 16
    $region29: #{net_forward.1} parent=1 // pred_fallthru
      _
    // Predicated region
    $region30: #{net_forward.1} parent=1 // pred_check
      _
    $region31: #{net_forward.1} parent=1 // pred_check_branch
      %60 = sbr.rel (0) target = $region33
    $region32: #{net_forward.1} parent=1 // pred_region
      %62 = dma.done [#allocation5], 16
    $region33: #{net_forward.1} parent=1 // pred_fallthru
      _
    // Predicated region
    $region34: #{net_forward.1} parent=1 // pred_check
      _
    $region35: #{net_forward.1} parent=1 // pred_check_branch
      %64 = sbr.rel (0) target = $region37
    $region36: #{net_forward.1} parent=1 // pred_region
      %66 = dma.done [#allocation8], 16
    $region37: #{net_forward.1} parent=1 // pred_fallthru
      _
    %67 = sfence
    %v68 = vld [vmem:[%s0] sm:$0x1]
    %v69 = vld [vmem:[%s0 + $0x1] sm:$0x1]
    %v70 = vld [vmem:[%s0 + $0x2] sm:$0x1]
    %v71 = vld [vmem:[%s0 + $0x3] sm:$0x1]
    %s72 = sld [smem:[#allocation2]]
    %v73 = vstv %s72
    %v74 = vmul.f32 %v68, %v73
    %s75 = sld [smem:[#allocation2 + $0xa]]
    %v76 = vstv %s75
    %v77 = vmul.f32 %v69, %v76
    %v78 = vadd.f32 %v74, %v77
    %s79 = sld [smem:[#allocation2 + $0x14]]
    %v80 = vstv %s79
    %v81 = vmul.f32 %v70, %v80
    %v82 = vadd.f32 %v78, %v81
    %s83 = sld [smem:[#allocation2 + $0x1e]]
    %v84 = vstv %s83
    %v85 = vmul.f32 %v71, %v84
    %v86 = vadd.f32 %v82, %v85
    %s87 = sld [smem:[#allocation4]]
    %v88 = vstv %s87
    %v89 = vadd.f32 %v86, %v88
    %v90 = vmax.f32 %v89, 0.0
    %s91 = sld [smem:[#allocation6]]
    %v92 = vstv %s91
    %v93 = vmul.f32 %v90, %v92
    %s94 = sld [smem:[#allocation6 + $0x1]]
    %v95 = vstv %s94
    %v96 = vmul.f32 %v90, %v95
    %s97 = sld [smem:[#allocation2 + $0x1]]
    %v98 = vstv %s97
    %v99 = vmul.f32 %v68, %v98
    %s100 = sld [smem:[#allocation2 + $0xb]]
    %v101 = vstv %s100
    %v102 = vmul.f32 %v69, %v101
    %v103 = vadd.f32 %v99, %v102
    %s104 = sld [smem:[#allocation2 + $0x15]]
    %v105 = vstv %s104
    %v106 = vmul.f32 %v70, %v105
    %v107 = vadd.f32 %v103, %v106
    %s108 = sld [smem:[#allocation2 + $0x1f]]
    %v109 = vstv %s108
    %v110 = vmul.f32 %v71, %v109
    %v111 = vadd.f32 %v107, %v110
    %s112 = sld [smem:[#allocation4 + $0x1]]
    %v113 = vstv %s112
    %v114 = vadd.f32 %v111, %v113
    %v115 = vmax.f32 %v114, 0.0
    %s116 = sld [smem:[#allocation6 + $0x2]]
    %v117 = vstv %s116
    %v118 = vmul.f32 %v115, %v117
    %v119 = vadd.f32 %v93, %v118
    %s120 = sld [smem:[#allocation6 + $0x3]]
    %v121 = vstv %s120
    %v122 = vmul.f32 %v115, %v121
    %v123 = vadd.f32 %v96, %v122
    %s124 = sld [smem:[#allocation2 + $0x2]]
    %v125 = vstv %s124
    %v126 = vmul.f32 %v68, %v125
    %s127 = sld [smem:[#allocation2 + $0xc]]
    %v128 = vstv %s127
    %v129 = vmul.f32 %v69, %v128
    %v130 = vadd.f32 %v126, %v129
    %s131 = sld [smem:[#allocation2 + $0x16]]
    %v132 = vstv %s131
    %v133 = vmul.f32 %v70, %v132
    %v134 = vadd.f32 %v130, %v133
    %s135 = sld [smem:[#allocation2 + $0x20]]
    %v136 = vstv %s135
    %v137 = vmul.f32 %v71, %v136
    %v138 = vadd.f32 %v134, %v137
    %s139 = sld [smem:[#allocation4 + $0x2]]
    %v140 = vstv %s139
    %v141 = vadd.f32 %v138, %v140
    %v142 = vmax.f32 %v141, 0.0
    %s143 = sld [smem:[#allocation6 + $0x4]]
    %v144 = vstv %s143
    %v145 = vmul.f32 %v142, %v144
    %v146 = vadd.f32 %v119, %v145
    %s147 = sld [smem:[#allocation6 + $0x5]]
    %v148 = vstv %s147
    %v149 = vmul.f32 %v142, %v148
    %v150 = vadd.f32 %v123, %v149
    %s151 = sld [smem:[#allocation2 + $0x3]]
    %v152 = vstv %s151
    %v153 = vmul.f32 %v68, %v152
    %s154 = sld [smem:[#allocation2 + $0xd]]
    %v155 = vstv %s154
    %v156 = vmul.f32 %v69, %v155
    %v157 = vadd.f32 %v153, %v156
    %s158 = sld [smem:[#allocation2 + $0x17]]
    %v159 = vstv %s158
    %v160 = vmul.f32 %v70, %v159
    %v161 = vadd.f32 %v157, %v160
    %s162 = sld [smem:[#allocation2 + $0x21]]
    %v163 = vstv %s162
    %v164 = vmul.f32 %v71, %v163
    %v165 = vadd.f32 %v161, %v164
    %s166 = sld [smem:[#allocation4 + $0x3]]
    %v167 = vstv %s166
    %v168 = vadd.f32 %v165, %v167
    %v169 = vmax.f32 %v168, 0.0
    %s170 = sld [smem:[#allocation6 + $0x6]]
    %v171 = vstv %s170
    %v172 = vmul.f32 %v169, %v171
    %v173 = vadd.f32 %v146, %v172
    %s174 = sld [smem:[#allocation6 + $0x7]]
    %v175 = vstv %s174
    %v176 = vmul.f32 %v169, %v175
    %v177 = vadd.f32 %v150, %v176
    %s178 = sld [smem:[#allocation2 + $0x4]]
    %v179 = vstv %s178
    %v180 = vmul.f32 %v68, %v179
    %s181 = sld [smem:[#allocation2 + $0xe]]
    %v182 = vstv %s181
    %v183 = vmul.f32 %v69, %v182
    %v184 = vadd.f32 %v180, %v183
    %s185 = sld [smem:[#allocation2 + $0x18]]
    %v186 = vstv %s185
    %v187 = vmul.f32 %v70, %v186
    %v188 = vadd.f32 %v184, %v187
    %s189 = sld [smem:[#allocation2 + $0x22]]
    %v190 = vstv %s189
    %v191 = vmul.f32 %v71, %v190
    %v192 = vadd.f32 %v188, %v191
    %s193 = sld [smem:[#allocation4 + $0x4]]
    %v194 = vstv %s193
    %v195 = vadd.f32 %v192, %v194
    %v196 = vmax.f32 %v195, 0.0
    %s197 = sld [smem:[#allocation6 + $0x8]]
    %v198 = vstv %s197
    %v199 = vmul.f32 %v196, %v198
    %v200 = vadd.f32 %v173, %v199
    %s201 = sld [smem:[#allocation6 + $0x9]]
    %v202 = vstv %s201
    %v203 = vmul.f32 %v196, %v202
    %v204 = vadd.f32 %v177, %v203
    %s205 = sld [smem:[#allocation2 + $0x5]]
    %v206 = vstv %s205
    %v207 = vmul.f32 %v68, %v206
    %s208 = sld [smem:[#allocation2 + $0xf]]
    %v209 = vstv %s208
    %v210 = vmul.f32 %v69, %v209
    %v211 = vadd.f32 %v207, %v210
    %s212 = sld [smem:[#allocation2 + $0x19]]
    %v213 = vstv %s212
    %v214 = vmul.f32 %v70, %v213
    %v215 = vadd.f32 %v211, %v214
    %s216 = sld [smem:[#allocation2 + $0x23]]
    %v217 = vstv %s216
    %v218 = vmul.f32 %v71, %v217
    %v219 = vadd.f32 %v215, %v218
    %s220 = sld [smem:[#allocation4 + $0x5]]
    %v221 = vstv %s220
    %v222 = vadd.f32 %v219, %v221
    %v223 = vmax.f32 %v222, 0.0
    %s224 = sld [smem:[#allocation6 + $0xa]]
    %v225 = vstv %s224
    %v226 = vmul.f32 %v223, %v225
    %v227 = vadd.f32 %v200, %v226
    %s228 = sld [smem:[#allocation6 + $0xb]]
    %v229 = vstv %s228
    %v230 = vmul.f32 %v223, %v229
    %v231 = vadd.f32 %v204, %v230
    %s232 = sld [smem:[#allocation2 + $0x6]]
    %v233 = vstv %s232
    %v234 = vmul.f32 %v68, %v233
    %s235 = sld [smem:[#allocation2 + $0x10]]
    %v236 = vstv %s235
    %v237 = vmul.f32 %v69, %v236
    %v238 = vadd.f32 %v234, %v237
    %s239 = sld [smem:[#allocation2 + $0x1a]]
    %v240 = vstv %s239
    %v241 = vmul.f32 %v70, %v240
    %v242 = vadd.f32 %v238, %v241
    %s243 = sld [smem:[#allocation2 + $0x24]]
    %v244 = vstv %s243
    %v245 = vmul.f32 %v71, %v244
    %v246 = vadd.f32 %v242, %v245
    %s247 = sld [smem:[#allocation4 + $0x6]]
    %v248 = vstv %s247
    %v249 = vadd.f32 %v246, %v248
    %v250 = vmax.f32 %v249, 0.0
    %s251 = sld [smem:[#allocation6 + $0xc]]
    %v252 = vstv %s251
    %v253 = vmul.f32 %v250, %v252
    %v254 = vadd.f32 %v227, %v253
    %s255 = sld [smem:[#allocation6 + $0xd]]
    %v256 = vstv %s255
    %v257 = vmul.f32 %v250, %v256
    %v258 = vadd.f32 %v231, %v257
    %s259 = sld [smem:[#allocation2 + $0x7]]
    %v260 = vstv %s259
    %v261 = vmul.f32 %v68, %v260
    %s262 = sld [smem:[#allocation2 + $0x11]]
    %v263 = vstv %s262
    %v264 = vmul.f32 %v69, %v263
    %v265 = vadd.f32 %v261, %v264
    %s266 = sld [smem:[#allocation2 + $0x1b]]
    %v267 = vstv %s266
    %v268 = vmul.f32 %v70, %v267
    %v269 = vadd.f32 %v265, %v268
    %s270 = sld [smem:[#allocation2 + $0x25]]
    %v271 = vstv %s270
    %v272 = vmul.f32 %v71, %v271
    %v273 = vadd.f32 %v269, %v272
    %s274 = sld [smem:[#allocation4 + $0x7]]
    %v275 = vstv %s274
    %v276 = vadd.f32 %v273, %v275
    %v277 = vmax.f32 %v276, 0.0
    %s278 = sld [smem:[#allocation6 + $0xe]]
    %v279 = vstv %s278
    %v280 = vmul.f32 %v277, %v279
    %v281 = vadd.f32 %v254, %v280
    %s282 = sld [smem:[#allocation6 + $0xf]]
    %v283 = vstv %s282
    %v284 = vmul.f32 %v277, %v283
    %v285 = vadd.f32 %v258, %v284
    %s286 = sld [smem:[#allocation2 + $0x8]]
    %v287 = vstv %s286
    %v288 = vmul.f32 %v68, %v287
    %s289 = sld [smem:[#allocation2 + $0x12]]
    %v290 = vstv %s289
    %v291 = vmul.f32 %v69, %v290
    %v292 = vadd.f32 %v288, %v291
    %s293 = sld [smem:[#allocation2 + $0x1c]]
    %v294 = vstv %s293
    %v295 = vmul.f32 %v70, %v294
    %v296 = vadd.f32 %v292, %v295
    %s297 = sld [smem:[#allocation2 + $0x26]]
    %v298 = vstv %s297
    %v299 = vmul.f32 %v71, %v298
    %v300 = vadd.f32 %v296, %v299
    %s301 = sld [smem:[#allocation4 + $0x8]]
    %v302 = vstv %s301
    %v303 = vadd.f32 %v300, %v302
    %v304 = vmax.f32 %v303, 0.0
    %s305 = sld [smem:[#allocation6 + $0x10]]
    %v306 = vstv %s305
    %v307 = vmul.f32 %v304, %v306
    %v308 = vadd.f32 %v281, %v307
    %s309 = sld [smem:[#allocation6 + $0x11]]
    %v310 = vstv %s309
    %v311 = vmul.f32 %v304, %v310
    %v312 = vadd.f32 %v285, %v311
    %s313 = sld [smem:[#allocation2 + $0x9]]
    %v314 = vstv %s313
    %v315 = vmul.f32 %v68, %v314
    %s316 = sld [smem:[#allocation2 + $0x13]]
    %v317 = vstv %s316
    %v318 = vmul.f32 %v69, %v317
    %v319 = vadd.f32 %v315, %v318
    %s320 = sld [smem:[#allocation2 + $0x1d]]
    %v321 = vstv %s320
    %v322 = vmul.f32 %v70, %v321
    %v323 = vadd.f32 %v319, %v322
    %s324 = sld [smem:[#allocation2 + $0x27]]
    %v325 = vstv %s324
    %v326 = vmul.f32 %v71, %v325
    %v327 = vadd.f32 %v323, %v326
    %s328 = sld [smem:[#allocation4 + $0x9]]
    %v329 = vstv %s328
    %v330 = vadd.f32 %v327, %v329
    %v331 = vmax.f32 %v330, 0.0
    %s332 = sld [smem:[#allocation6 + $0x12]]
    %v333 = vstv %s332
    %v334 = vmul.f32 %v331, %v333
    %v335 = vadd.f32 %v308, %v334
    %s336 = sld [smem:[#allocation6 + $0x13]]
    %v337 = vstv %s336
    %v338 = vmul.f32 %v331, %v337
    %v339 = vadd.f32 %v312, %v338
    %s340 = sld [smem:[#allocation7]]
    %v341 = vstv %s340
    %v342 = vadd.f32 %v335, %v341
    %343 = vst [vmem:[%s5] sm:$0x1] %v342
    %s344 = sld [smem:[#allocation7 + $0x1]]
    %v345 = vstv %s344
    %v346 = vadd.f32 %v339, %v345
    %s347 = scalar_lea.vmem %s5, 1
    %348 = vst [vmem:[%s347] sm:$0x1] %v346
    // Predicated region
    $region38: #{net_forward.1} parent=1 // pred_check
      _
    $region39: #{net_forward.1} parent=1 // pred_check_branch
      %350 = sbr.rel (0) target = $region41
    $region40: #{net_forward.1} parent=1 // pred_region
      _
    $region41: #{net_forward.1} parent=1 // pred_fallthru
      _
    // Predicated region
    $region42: #{net_forward.1} parent=1 // pred_check
      _
    $region43: #{net_forward.1} parent=1 // pred_check_branch
      %352 = sbr.rel (0) target = $region45
    $region44: #{net_forward.1} parent=1 // pred_region
      _
    $region45: #{net_forward.1} parent=1 // pred_fallthru
      _
    %353 = vsyncpa [#allocation3], 1
    %354 = vsyncpa [#allocation5], 1
    %355 = vsyncpa [#allocation8], 1

</llo_original>
